<compile_context>
chip_gen: v7x
topology: tpu7x:2x2x1
jax: 0.10.0
libtpu: 0.0.40
codegen_flags: <defaults>
</compile_context>

<pallas_src>
import functools

import jax
import jax.numpy as jnp
from jax import lax
from jax.experimental import pallas as pl
from jax.experimental.pallas import tpu as pltpu


def _upsample_conv_kernel(x_ref, w_ref, o_ref, im_ref, *, th, w_out, cin):
    """Fused 3x3 conv (bias=False) over one padded row-tile.

    x_ref : (TH+2, W+2, Cin)   bf16 padded input tile (1-row / 1-col halo)
    w_ref : (9*Cin, Cout)      bf16 weights, row index = (ky*3 + kx)*Cin + ci
    o_ref : (TH, W, Cout)      f32 conv output tile (pad columns already dropped)
    im_ref: (TH*W, 9*Cin)      bf16 in-VMEM im2col scratch
    """
    m = th * w_out
    x = x_ref[...]                                   # load tile once
    for ky in range(3):
        for kx in range(3):
            tap = ky * 3 + kx
            im_ref[:, tap * cin:(tap + 1) * cin] = (
                x[ky:ky + th, kx:kx + w_out, :].reshape(m, cin))
    acc = jnp.dot(im_ref[...], w_ref[...],
                  preferred_element_type=jnp.float32)        # (TH*W, Cout) single MXU pass
    o_ref[...] = acc.reshape(th, w_out, o_ref.shape[2]).astype(o_ref.dtype)


def upsample_forward(x_nchw, weight_oihw, *, tile_h=8):
    """UpSample.forward: PixelShuffle(2)(Conv2d(C, 2C, 3, padding=1, bias=False)(x))."""
    B, C, H, W = x_nchw.shape
    O, I, KH, KW = weight_oihw.shape
    assert I == C and O == 2 * C and KH == 3 and KW == 3 and O % 4 == 0
    Cf = O // 4                                   # channels after PixelShuffle(2)

    # Row-tile height: largest divisor of H that is <= tile_h.
    TH = max(1, min(tile_h, H))
    while H % TH:
        TH -= 1
    T = H // TH
    THp, Wp = TH + 2, W + 2

    # bf16 operands (f32 accumulation happens inside the kernel).
    xb = x_nchw.astype(jnp.bfloat16)
    x_nhwc = jnp.transpose(xb, (0, 2, 3, 1))                       # (B, H, W, C)
    xp = jnp.pad(x_nhwc, ((0, 0), (1, 1), (1, 1), (0, 0)))         # (B, H+2, Wp, C)
    # Overlapping row tiles with a 1-row halo on each side -> (B, T, TH+2, Wp, C).
    row_idx = jnp.arange(T)[:, None] * TH + jnp.arange(THp)[None, :]
    x_tiles = xp[:, row_idx]                                       # (B, T, THp, Wp, C)

    # PyTorch OIHW weights -> (9*C, O), row index = (ky*3 + kx)*C + ci.
    w = jnp.transpose(weight_oihw, (2, 3, 1, 0)).reshape(9 * C, O).astype(jnp.bfloat16)

    kernel = functools.partial(_upsample_conv_kernel, th=TH, w_out=W, cin=C)

    flops = 2 * B * H * W * (9 * C) * O
    bytes_accessed = x_tiles.size * 2 + w.size * 2 + B * H * W * O * 4

    conv = pl.pallas_call(
        kernel,
        out_shape=jax.ShapeDtypeStruct((B, H, W, O), jnp.float32),
        grid=(B, T),
        in_specs=[
            # One padded row-tile per step (leading batch/tile dims squeezed away).
            pl.BlockSpec((None, None, THp, Wp, C), lambda b, t: (b, t, 0, 0, 0)),
            # Weights: constant block index -> fetched once, never re-DMA'd.
            pl.BlockSpec((9 * C, O), lambda b, t: (0, 0)),
        ],
        out_specs=pl.BlockSpec((None, TH, W, O), lambda b, t: (b, t, 0, 0)),
        scratch_shapes=[pltpu.VMEM((TH * W, 9 * C), jnp.bfloat16)],   # im2col LHS
        compiler_params=pltpu.CompilerParams(
            dimension_semantics=("parallel", "parallel")),
        cost_estimate=pl.CostEstimate(
            flops=flops, transcendentals=0, bytes_accessed=bytes_accessed),
    )(x_tiles, w)

    # PixelShuffle(2): conv channel o = 4*c + 2*i + j  ->  out[b, c, 2h+i, 2w+j].
    y = conv.reshape(B, H, W, Cf, 2, 2)
    y = jnp.transpose(y, (0, 3, 1, 4, 2, 5))
    return y.reshape(B, Cf, 2 * H, 2 * W)


def _upsample_reference(x_nchw, weight_oihw):
    """Pure-JAX reference (XLA conv + pixel shuffle) for a numerical check."""
    conv = lax.conv_general_dilated(
        x_nchw, weight_oihw, window_strides=(1, 1),
        padding=((1, 1), (1, 1)),
        dimension_numbers=("NCHW", "OIHW", "NCHW"),
        precision=lax.Precision.HIGHEST)
    B, O, H, W = conv.shape
    Cf = O // 4
    y = conv.reshape(B, Cf, 2, 2, H, W)
    y = jnp.transpose(y, (0, 1, 4, 2, 5, 3))
    return y.reshape(B, Cf, 2 * H, 2 * W)


if __name__ == "__main__":
    key = jax.random.PRNGKey(0)
    kx, kw = jax.random.split(key)

    B, C, H, W = 2, 64, 16, 16
    x = jax.random.normal(kx, (B, C, H, W), jnp.float32)
    weight = jax.random.normal(kw, (2 * C, C, 3, 3), jnp.float32) * 0.05

    fwd = jax.jit(upsample_forward)
    out = jax.block_until_ready(fwd(x, weight))

    assert out.shape == (B, C // 2, 2 * H, 2 * W) and out.dtype == jnp.float32

    ref = jax.block_until_ready(_upsample_reference(x, weight))
    rel_err = float(jnp.max(jnp.abs(out - ref)) / jnp.max(jnp.abs(ref)))
    # Tolerance accommodates bf16 conv operands (f32 accumulation).
    assert rel_err < 2e-2, f"mismatch vs reference: rel err = {rel_err}"

    print("KERNEL_OK")
</pallas_src>

<mosaic_0001>
module attributes {stable_mosaic.version = 11 : i64} {
  func.func @_upsample_conv_kernel(%arg0: i32, %arg1: i32, %arg2: memref<1x1x10x18x64xbf16, #tpu.memory_space<vmem>>, %arg3: memref<576x128xbf16, #tpu.memory_space<vmem>>, %arg4: memref<1x8x16x128xf32, #tpu.memory_space<vmem>>, %arg5: memref<128x576xbf16, #tpu.memory_space<vmem>>) attributes {dimension_semantics = [#tpu.dimension_semantics<parallel>, #tpu.dimension_semantics<parallel>], iteration_bounds = array<i64: 2, 2>, scalar_prefetch = 0 : i64, scratch_operands = 1 : i64, tpu.core_type = #tpu.core_type<tc>, window_params = [{transform_indices = @transform_0, window_bounds = array<i64: 1, 1, 10, 18, 64>}, {pipeline_mode = #tpu.pipeline_mode<synchronous>, transform_indices = @transform_1, window_bounds = array<i64: 576, 128>}, {transform_indices = @transform_2, window_bounds = array<i64: 1, 8, 16, 128>}]} {
    %c0 = arith.constant 0 : index
    %c0_0 = arith.constant 0 : index
    %c0_1 = arith.constant 0 : index
    %c0_2 = arith.constant 0 : index
    %c0_3 = arith.constant 0 : index
    %0 = vector.load %arg2[%c0, %c0_0, %c0_1, %c0_2, %c0_3] : memref<1x1x10x18x64xbf16, #tpu.memory_space<vmem>>, vector<1x1x10x18x64xbf16>
    %1 = vector.shape_cast %0 : vector<1x1x10x18x64xbf16> to vector<10x18x64xbf16>
    %2 = vector.extract_strided_slice %1 {offsets = [0, 0, 0], sizes = [8, 16, 64], strides = [1, 1, 1]} : vector<10x18x64xbf16> to vector<8x16x64xbf16>
    %3 = vector.shape_cast %2 : vector<8x16x64xbf16> to vector<128x64xbf16>
    %c0_4 = arith.constant 0 : index
    %c0_5 = arith.constant 0 : index
    %4 = vector.load %arg5[%c0_4, %c0_5] : memref<128x576xbf16, #tpu.memory_space<vmem>>, vector<128x64xbf16>
    tpu.vector_store %arg5[%c0_4, %c0_5], %3 {strides = array<i32>} : memref<128x576xbf16, #tpu.memory_space<vmem>>, vector<128x64xbf16>,
    %5 = vector.extract_strided_slice %1 {offsets = [0, 1, 0], sizes = [8, 16, 64], strides = [1, 1, 1]} : vector<10x18x64xbf16> to vector<8x16x64xbf16>
    %6 = vector.shape_cast %5 : vector<8x16x64xbf16> to vector<128x64xbf16>
    %c0_6 = arith.constant 0 : index
    %c64 = arith.constant 64 : index
    %7 = vector.load %arg5[%c0_6, %c64] : memref<128x576xbf16, #tpu.memory_space<vmem>>, vector<128x64xbf16>
    tpu.vector_store %arg5[%c0_6, %c64], %6 {strides = array<i32>} : memref<128x576xbf16, #tpu.memory_space<vmem>>, vector<128x64xbf16>,
    %8 = vector.extract_strided_slice %1 {offsets = [0, 2, 0], sizes = [8, 16, 64], strides = [1, 1, 1]} : vector<10x18x64xbf16> to vector<8x16x64xbf16>
    %9 = vector.shape_cast %8 : vector<8x16x64xbf16> to vector<128x64xbf16>
    %c0_7 = arith.constant 0 : index
    %c128 = arith.constant 128 : index
    %10 = vector.load %arg5[%c0_7, %c128] : memref<128x576xbf16, #tpu.memory_space<vmem>>, vector<128x64xbf16>
    tpu.vector_store %arg5[%c0_7, %c128], %9 {strides = array<i32>} : memref<128x576xbf16, #tpu.memory_space<vmem>>, vector<128x64xbf16>,
    %11 = vector.extract_strided_slice %1 {offsets = [1, 0, 0], sizes = [8, 16, 64], strides = [1, 1, 1]} : vector<10x18x64xbf16> to vector<8x16x64xbf16>
    %12 = vector.shape_cast %11 : vector<8x16x64xbf16> to vector<128x64xbf16>
    %c0_8 = arith.constant 0 : index
    %c192 = arith.constant 192 : index
    %13 = vector.load %arg5[%c0_8, %c192] : memref<128x576xbf16, #tpu.memory_space<vmem>>, vector<128x64xbf16>
    tpu.vector_store %arg5[%c0_8, %c192], %12 {strides = array<i32>} : memref<128x576xbf16, #tpu.memory_space<vmem>>, vector<128x64xbf16>,
    %14 = vector.extract_strided_slice %1 {offsets = [1, 1, 0], sizes = [8, 16, 64], strides = [1, 1, 1]} : vector<10x18x64xbf16> to vector<8x16x64xbf16>
    %15 = vector.shape_cast %14 : vector<8x16x64xbf16> to vector<128x64xbf16>
    %c0_9 = arith.constant 0 : index
    %c256 = arith.constant 256 : index
    %16 = vector.load %arg5[%c0_9, %c256] : memref<128x576xbf16, #tpu.memory_space<vmem>>, vector<128x64xbf16>
    tpu.vector_store %arg5[%c0_9, %c256], %15 {strides = array<i32>} : memref<128x576xbf16, #tpu.memory_space<vmem>>, vector<128x64xbf16>,
    %17 = vector.extract_strided_slice %1 {offsets = [1, 2, 0], sizes = [8, 16, 64], strides = [1, 1, 1]} : vector<10x18x64xbf16> to vector<8x16x64xbf16>
    %18 = vector.shape_cast %17 : vector<8x16x64xbf16> to vector<128x64xbf16>
    %c0_10 = arith.constant 0 : index
    %c320 = arith.constant 320 : index
    %19 = vector.load %arg5[%c0_10, %c320] : memref<128x576xbf16, #tpu.memory_space<vmem>>, vector<128x64xbf16>
    tpu.vector_store %arg5[%c0_10, %c320], %18 {strides = array<i32>} : memref<128x576xbf16, #tpu.memory_space<vmem>>, vector<128x64xbf16>,
    %20 = vector.extract_strided_slice %1 {offsets = [2, 0, 0], sizes = [8, 16, 64], strides = [1, 1, 1]} : vector<10x18x64xbf16> to vector<8x16x64xbf16>
    %21 = vector.shape_cast %20 : vector<8x16x64xbf16> to vector<128x64xbf16>
    %c0_11 = arith.constant 0 : index
    %c384 = arith.constant 384 : index
    %22 = vector.load %arg5[%c0_11, %c384] : memref<128x576xbf16, #tpu.memory_space<vmem>>, vector<128x64xbf16>
    tpu.vector_store %arg5[%c0_11, %c384], %21 {strides = array<i32>} : memref<128x576xbf16, #tpu.memory_space<vmem>>, vector<128x64xbf16>,
    %23 = vector.extract_strided_slice %1 {offsets = [2, 1, 0], sizes = [8, 16, 64], strides = [1, 1, 1]} : vector<10x18x64xbf16> to vector<8x16x64xbf16>
    %24 = vector.shape_cast %23 : vector<8x16x64xbf16> to vector<128x64xbf16>
    %c0_12 = arith.constant 0 : index
    %c448 = arith.constant 448 : index
    %25 = vector.load %arg5[%c0_12, %c448] : memref<128x576xbf16, #tpu.memory_space<vmem>>, vector<128x64xbf16>
    tpu.vector_store %arg5[%c0_12, %c448], %24 {strides = array<i32>} : memref<128x576xbf16, #tpu.memory_space<vmem>>, vector<128x64xbf16>,
    %26 = vector.extract_strided_slice %1 {offsets = [2, 2, 0], sizes = [8, 16, 64], strides = [1, 1, 1]} : vector<10x18x64xbf16> to vector<8x16x64xbf16>
    %27 = vector.shape_cast %26 : vector<8x16x64xbf16> to vector<128x64xbf16>
    %c0_13 = arith.constant 0 : index
    %c512 = arith.constant 512 : index
    %28 = vector.load %arg5[%c0_13, %c512] : memref<128x576xbf16, #tpu.memory_space<vmem>>, vector<128x64xbf16>
    tpu.vector_store %arg5[%c0_13, %c512], %27 {strides = array<i32>} : memref<128x576xbf16, #tpu.memory_space<vmem>>, vector<128x64xbf16>,
    %c0_14 = arith.constant 0 : index
    %c0_15 = arith.constant 0 : index
    %29 = vector.load %arg5[%c0_14, %c0_15] : memref<128x576xbf16, #tpu.memory_space<vmem>>, vector<128x576xbf16>
    %c0_16 = arith.constant 0 : index
    %c0_17 = arith.constant 0 : index
    %30 = vector.load %arg3[%c0_16, %c0_17] : memref<576x128xbf16, #tpu.memory_space<vmem>>, vector<576x128xbf16>
    %cst = arith.constant dense<0.000000e+00> : vector<128x128xf32>
    %31 = tpu.matmul %29, %30, %cst {dimension_numbers = #tpu.dot_dimension_numbers<[1], [0], [0], [1], [0, 0, 1, 1], [], []>} : vector<128x576xbf16>, vector<576x128xbf16>, vector<128x128xf32> -> vector<128x128xf32>
    %32 = vector.shape_cast %31 : vector<128x128xf32> to vector<8x16x128xf32>
    %c0_18 = arith.constant 0 : index
    %c0_19 = arith.constant 0 : index
    %c0_20 = arith.constant 0 : index
    %c0_21 = arith.constant 0 : index
    %33 = vector.load %arg4[%c0_18, %c0_19, %c0_20, %c0_21] : memref<1x8x16x128xf32, #tpu.memory_space<vmem>>, vector<1x8x16x128xf32>
    %34 = vector.shape_cast %33 : vector<1x8x16x128xf32> to vector<8x16x128xf32>
    %35 = vector.shape_cast %32 : vector<8x16x128xf32> to vector<1x8x16x128xf32>
    tpu.vector_store %arg4[%c0_18, %c0_19, %c0_20, %c0_21], %35 {strides = array<i32>} : memref<1x8x16x128xf32, #tpu.memory_space<vmem>>, vector<1x8x16x128xf32>,
    return
  }
  func.func @transform_0(%arg0: i32, %arg1: i32) -> (i32, i32, i32, i32, i32) {
    %c0_i32 = arith.constant 0 : i32
    %c0_i32_0 = arith.constant 0 : i32
    %c0_i32_1 = arith.constant 0 : i32
    %c0_i32_2 = arith.constant 0 : i32
    return %arg0, %arg1, %c0_i32, %c0_i32_0, %c0_i32_1 : i32, i32, i32, i32, i32
  }
  func.func @transform_1(%arg0: i32, %arg1: i32) -> (i32, i32) {
    %c0_i32 = arith.constant 0 : i32
    %c0_i32_0 = arith.constant 0 : i32
    %c0_i32_1 = arith.constant 0 : i32
    return %c0_i32, %c0_i32_0 : i32, i32
  }
  func.func @transform_2(%arg0: i32, %arg1: i32) -> (i32, i32, i32, i32) {
    %c0_i32 = arith.constant 0 : i32
    %c0_i32_0 = arith.constant 0 : i32
    %c0_i32_1 = arith.constant 0 : i32
    return %arg0, %arg1, %c0_i32, %c0_i32_0 : i32, i32, i32, i32
  }
}

</mosaic_0001>

<llo_original>
// kernel: upsample_forward.1
$region0: #{upsample_forward.1}
  #allocation0 [shape = 'u32[]', space=smem, size = 0x4, offset = 0x4, fixed_abs, tag = 'smem constant byte address 0x4 - core index']
  #allocation1 [shape = 'u32[144,128]{1,0:T(1,128)}', space=vmem, size = 0x12000, scoped, tag = 'internal scratch']
  #allocation2 [shape = 'bf16[128,576]{1,0:T(16,128)(2,1)}', space=vmem, size = 0x28000, scoped, tag = 'scratch operand']
  %s0 = inlined_call_operand.vmem [shape: bf16[2,2,10,18,64], index: 0, kind: input, shape index: {}]
  %s1 = inlined_call_operand.vmem [shape: bf16[576,128], index: 1, kind: input, shape index: {}]
  %s2 = inlined_call_operand.vmem [shape: f32[2,16,16,128], index: 2, kind: output, shape index: {}]
  %s3 = sld [smem:[#allocation0]]
  $region41: #{upsample_forward.1} parent=0
    _
  %s5 = ssub.s32 1, %s3
  %s6 = scalar_select 0, %s5, %s3
  loop: start=0, step=1, limit=6
  $region2: #{upsample_forward.1} parent=0 // loop_pre_header
    _
  $region3: #{upsample_forward.1} parent=0 // loop_header
    %s8 = sphi 0, %s12
    %p9 = scmp.ge.s32.totalorder %s8, 6
    %s15 = sphi 0, %s27
    %s16 = sphi 0, %s23
    %s17 = sphi 0, %s15
    %s18 = sphi 0, %s16
    %s19 = sphi 0, %s17
    %s20 = sphi 0, %s18
    %s32 = sphi 0, %s34
    %s35 = sphi 0, %s32
    %s36 = sphi 0, %s35
    %s52 = sphi 0, %s36
    %s56 = sphi 0, %s56
    %s58 = sphi 0, %s56
    %s59 = sphi 0, %s58
    %s73 = sphi 0, %s59
    %s81 = sphi 0, %s83
    %s84 = sphi 0, %s81
    %s85 = sphi 0, %s84
    %s101 = sphi 0, %s85
  $region4: #{upsample_forward.1} parent=0 // loop_header_branch
    %11 = sbr.rel (%p9) target = $region8
  $region5: #{upsample_forward.1} parent=0 // loop_body
    %s13 = ssub.s32 %s8, 1
    %s14 = ssub.s32 %s8, 2
    %s21 = sadd.s32 1, %s16
    %p22 = scmp.ge.s32.totalorder %s21, 2
    %s23 = scalar_select %p22, 0, %s21
    %s24 = sadd.s32 1, %s15
    %s25 = scalar_select %p22, %s24, %s15
    %p26 = scmp.ge.s32.totalorder %s25, 2
    %s27 = scalar_select %p26, 0, %s25
    %s28 = ssub.s32 %s15, %s27
    %s29 = ssub.s32 %s16, %s23
    %s30 = sor.u32 %s28, %s29
    %p31 = scmp.eq.s32.totalorder %s30, 0
    %s33 = sadd.s32 %s32, 1
    %s34 = scalar_select %p31, %s32, %s33
    %p37 = pneg %p31
    %p38 = scmp.eq.s32.totalorder %s8, 3
    %p39 = por %p37, %p38
    %p40 = scmp.ne.s32.totalorder %s32, %s35
    %p41 = scmp.eq.s32.totalorder %s8, 0
    %p42 = por %p40, %p41
    %p43 = scmp.ne.s32.totalorder %s32, %s35
    %p44 = scmp.eq.s32.totalorder %s13, 3
    %p45 = por %p43, %p44
    %p46 = scmp.ne.s32.totalorder %s35, %s36
    %p47 = scmp.eq.s32.totalorder %s13, 0
    %p48 = por %p46, %p47
    %p49 = scmp.ne.s32.totalorder %s35, %s36
    %p50 = scmp.eq.s32.totalorder %s14, 3
    %p51 = por %p49, %p50
    %p53 = scmp.ne.s32.totalorder %s36, %s52
    %p54 = scmp.eq.s32.totalorder %s14, 0
    %p55 = por %p53, %p54
    %s57 = sadd.s32 %s56, 1
    %p60 = scmp.eq.s32.totalorder %s8, 3
    %p61 = scmp.ne.s32.totalorder %s56, %s58
    %p62 = scmp.eq.s32.totalorder %s8, 0
    %p63 = por %p61, %p62
    %p64 = scmp.ne.s32.totalorder %s56, %s58
    %p65 = scmp.eq.s32.totalorder %s13, 3
    %p66 = por %p64, %p65
    %p67 = scmp.ne.s32.totalorder %s58, %s59
    %p68 = scmp.eq.s32.totalorder %s13, 0
    %p69 = por %p67, %p68
    %p70 = scmp.ne.s32.totalorder %s58, %s59
    %p71 = scmp.eq.s32.totalorder %s14, 3
    %p72 = por %p70, %p71
    %p74 = scmp.ne.s32.totalorder %s59, %s73
    %p75 = scmp.eq.s32.totalorder %s14, 0
    %p76 = por %p74, %p75
    %s77 = ssub.s32 %s15, %s27
    %s78 = ssub.s32 %s16, %s23
    %s79 = sor.u32 %s77, %s78
    %p80 = scmp.eq.s32.totalorder %s79, 0
    %s82 = sadd.s32 %s81, 1
    %s83 = scalar_select %p80, %s81, %s82
    %p86 = pneg %p80
    %p87 = scmp.eq.s32.totalorder %s8, 3
    %p88 = por %p86, %p87
    %p89 = scmp.ne.s32.totalorder %s81, %s84
    %p90 = scmp.eq.s32.totalorder %s8, 0
    %p91 = por %p89, %p90
    %p92 = scmp.ne.s32.totalorder %s81, %s84
    %p93 = scmp.eq.s32.totalorder %s13, 3
    %p94 = por %p92, %p93
    %p95 = scmp.ne.s32.totalorder %s84, %s85
    %p96 = scmp.eq.s32.totalorder %s13, 0
    %p97 = por %p95, %p96
    %p98 = scmp.ne.s32.totalorder %s84, %s85
    %p99 = scmp.eq.s32.totalorder %s14, 3
    %p100 = por %p98, %p99
    %p102 = scmp.ne.s32.totalorder %s85, %s101
    %p103 = scmp.eq.s32.totalorder %s14, 0
    %p104 = por %p102, %p103
    %p105 = scmp.le.s32.totalorder 1, %s8
    %p106 = scmp.lt.s32.totalorder %s8, 5
    %p107 = pnand %p105, %p106
    %p108 = pneg %p107
    // Predicated region
    $region9: #{upsample_forward.1} parent=5 // pred_check
      _
    $region10: #{upsample_forward.1} parent=5 // pred_check_branch
      %110 = sbr.rel (%p107) target = $region12
    $region11: #{upsample_forward.1} parent=5 // pred_region
      %s111 = ssub.s32 %s8, 1
      // Predicated region
      $region13: #{upsample_forward.1} parent=11 // pred_check
        %p112 = pneg %p69
      $region14: #{upsample_forward.1} parent=11 // pred_check_branch
        %114 = sbr.rel (%p112) target = $region16
      $region15: #{upsample_forward.1} parent=11 // pred_region
        _
      $region16: #{upsample_forward.1} parent=11 // pred_fallthru
        _
    $region12: #{upsample_forward.1} parent=5 // pred_fallthru
      _
    %p115 = scmp.lt.s32.totalorder %s8, 4
    // Predicated region
    $region17: #{upsample_forward.1} parent=5 // pred_check
      %p116 = pneg %p115
    $region18: #{upsample_forward.1} parent=5 // pred_check_branch
      %118 = sbr.rel (%p116) target = $region20
    $region19: #{upsample_forward.1} parent=5 // pred_region
      // Predicated region
      $region21: #{upsample_forward.1} parent=19 // pred_check
        %p119 = pneg %p42
      $region22: #{upsample_forward.1} parent=19 // pred_check_branch
        %121 = sbr.rel (%p119) target = $region24
      $region23: #{upsample_forward.1} parent=19 // pred_region
        %p122 = scmp.lt.s32.totalorder %s15, 1
        %s123 = scalar_select %p122, %s15, 1
        %p124 = scmp.lt.s32.totalorder %s16, 1
        %s125 = scalar_select %p124, %s16, 1
        %s126 = smul.addr %s125, 30
        %s127 = smul.addr %s123, 60
        %s128 = sadd.s32 %s126, %s127
        %s129 = smul.addr %s128, 4
        %s130 = scalar_lea.vmem %s0, %s129
      $region24: #{upsample_forward.1} parent=19 // pred_fallthru
        _
    $region20: #{upsample_forward.1} parent=5 // pred_fallthru
      _
    %p131 = scmp.le.s32.totalorder 1, %s8
    %p132 = scmp.lt.s32.totalorder %s8, 5
    %p133 = pnand %p131, %p132
    %p134 = pneg %p133
    // Predicated region
    $region25: #{upsample_forward.1} parent=5 // pred_check
      _
    $region26: #{upsample_forward.1} parent=5 // pred_check_branch
      %136 = sbr.rel (%p133) target = $region28
    $region27: #{upsample_forward.1} parent=5 // pred_region
      %s137 = ssub.s32 %s8, 1
      %p138 = scmp.lt.s32.totalorder %s17, 1
      %s139 = scalar_select %p138, %s17, 1
      %p140 = scmp.lt.s32.totalorder %s18, 1
      %s141 = scalar_select %p140, %s18, 1
      %s142 = smul.addr %s141, 30
      %s143 = smul.addr %s139, 60
      %s144 = sadd.s32 %s142, %s143
      %s145 = smul.addr %s144, 4
      %s146 = scalar_lea.vmem %s0, %s145
      %p147 = pneg %p48
      %p148 = pneg %p45
      %p149 = pneg %p69
      %p150 = pneg %p66
      %p151 = pneg %p97
      %p152 = pneg %p94
      %s153 = smul.u32 8, %s18
      %p154 = scmp.lt.s32.totalorder %s17, 1
      %s155 = scalar_select %p154, %s17, 1
      %p156 = scmp.lt.s32.totalorder %s153, 15
      %s157 = scalar_select %p156, %s153, 15
      %s158 = smul.addr %s157, 2
      %s159 = smul.addr %s155, 32
      %s160 = sadd.s32 %s158, %s159
      %s161 = smul.addr %s160, 8
      %s162 = scalar_lea.vmem %s2, %s161
      %p163 = scmp.lt.s32.totalorder %s17, 1
      %s164 = scalar_select %p163, %s17, 1
      %p165 = scmp.lt.s32.totalorder %s18, 1
      %s166 = scalar_select %p165, %s18, 1
      %s167 = smul.addr %s166, 30
      %s168 = smul.addr %s164, 60
      %s169 = sadd.s32 %s167, %s168
      %s170 = smul.addr %s169, 4
      %s171 = scalar_lea.vmem %s0, %s170
      %s172 = smul.u32 8, %s18
      %p173 = scmp.lt.s32.totalorder %s17, 1
      %s174 = scalar_select %p173, %s17, 1
      %p175 = scmp.lt.s32.totalorder %s172, 15
      %s176 = scalar_select %p175, %s172, 15
      %s177 = smul.addr %s176, 2
      %s178 = smul.addr %s174, 32
      %s179 = sadd.s32 %s177, %s178
      %s180 = smul.addr %s179, 8
      %s181 = scalar_lea.vmem %s2, %s180
      %s182 = smul.u32 8, %s18
      %v184 = vld [vmem:[%s171] sm:$0xf]
      %v185 = vld [vmem:[%s171 + $0x4] sm:$0xf]
      %v186 = vld [vmem:[%s171 + $0x8] sm:$0x1]
      %v187 = vld [vmem:[%s171 + $0xc] sm:$0xf]
      %v188 = vld [vmem:[%s171 + $0x10] sm:$0xf]
      %v189 = vld [vmem:[%s171 + $0x14] sm:$0x1]
      %v190 = vld [vmem:[%s171 + $0x18] sm:$0xf]
      %v191 = vld [vmem:[%s171 + $0x1c] sm:$0xf]
      %v192 = vld [vmem:[%s171 + $0x20] sm:$0x1]
      %v193 = vld [vmem:[%s171 + $0x24] sm:$0xf]
      %v194 = vld [vmem:[%s171 + $0x28] sm:$0xf]
      %v195 = vld [vmem:[%s171 + $0x2c] sm:$0x1]
      %v196 = vld [vmem:[%s171 + $0x30] sm:$0xf]
      %v197 = vld [vmem:[%s171 + $0x34] sm:$0xf]
      %v198 = vld [vmem:[%s171 + $0x38] sm:$0x1]
      %v199 = vld [vmem:[%s171 + $0x3c] sm:$0xf]
      %v200 = vld [vmem:[%s171 + $0x40] sm:$0xf]
      %v201 = vld [vmem:[%s171 + $0x44] sm:$0x1]
      %v202 = vld [vmem:[%s171 + $0x48] sm:$0xf]
      %v203 = vld [vmem:[%s171 + $0x4c] sm:$0xf]
      %v204 = vld [vmem:[%s171 + $0x50] sm:$0x1]
      %v205 = vld [vmem:[%s171 + $0x54] sm:$0xf]
      %v206 = vld [vmem:[%s171 + $0x58] sm:$0xf]
      %v207 = vld [vmem:[%s171 + $0x5c] sm:$0x1]
      %v208 = vld [vmem:[%s171 + $0x60] sm:$0xf]
      %v209 = vld [vmem:[%s171 + $0x64] sm:$0xf]
      %v210 = vld [vmem:[%s171 + $0x68] sm:$0x1]
      %v211 = vld [vmem:[%s171 + $0x6c] sm:$0xf]
      %v212 = vld [vmem:[%s171 + $0x70] sm:$0xf]
      %v213 = vld [vmem:[%s171 + $0x74] sm:$0x1]
      %v230 = vunpack.c.l.b16 %v184
      %v231 = vunpack.c.l.b16 %v185
      %v232 = vunpack.c.l.b16 %v187
      %v233 = vunpack.c.l.b16 %v188
      %v234 = vunpack.c.l.b16 %v190
      %v235 = vunpack.c.l.b16 %v191
      %v236 = vunpack.c.l.b16 %v193
      %v237 = vunpack.c.l.b16 %v194
      %v238 = vunpack.c.l.b16 %v196
      %v239 = vunpack.c.l.b16 %v197
      %v240 = vunpack.c.l.b16 %v199
      %v241 = vunpack.c.l.b16 %v200
      %v242 = vunpack.c.l.b16 %v202
      %v243 = vunpack.c.l.b16 %v203
      %v244 = vunpack.c.l.b16 %v205
      %v245 = vunpack.c.l.b16 %v206
      %v246 = vpack.c.b16 %v231, %v230
      %v247 = vpack.c.b16 %v233, %v232
      %v248 = vpack.c.b16 %v235, %v234
      %v249 = vpack.c.b16 %v237, %v236
      %v250 = vpack.c.b16 %v239, %v238
      %v251 = vpack.c.b16 %v241, %v240
      %v252 = vpack.c.b16 %v243, %v242
      %v253 = vpack.c.b16 %v245, %v244
      %vm262 = vcmask 523264
      %263 = vst.msk [vmem:[#allocation2] sm:$0xff] %vm262, %v246
      %264 = vst.msk [vmem:[#allocation2 + $0x28] sm:$0xff] %vm262, %v247
      %265 = vst.msk [vmem:[#allocation2 + $0x50] sm:$0xff] %vm262, %v248
      %266 = vst.msk [vmem:[#allocation2 + $0x78] sm:$0xff] %vm262, %v249
      %267 = vst.msk [vmem:[#allocation2 + $0xa0] sm:$0xff] %vm262, %v250
      %268 = vst.msk [vmem:[#allocation2 + $0xc8] sm:$0xff] %vm262, %v251
      %269 = vst.msk [vmem:[#allocation2 + $0xf0] sm:$0xff] %vm262, %v252
      %270 = vst.msk [vmem:[#allocation2 + $0x118] sm:$0xff] %vm262, %v253
      %vm271 = vsmask.f32 3328
      %vm272 = vsmask.f32 7440
      %vm273 = vmor %vm271, %vm272
      %v275 = vshrl.u32 %v184, 16
      %v277 = vrot.slane %v275, 4
      %v278 = vshll.u32 %v184, 16
      %v280 = vrot.slane %v278, 5
      %v281 = vor.u32 %v277, %v280
      %v282 = vrot.slane %v281, 4
      %v284 = vshll.u32 %v185, 16
      %v286 = vrot.slane %v284, 5
      %v287 = vsel %vm273, %v282, %v286
      %v288 = vshrl.u32 %v185, 16
      %v290 = vrot.slane %v288, 4
      %v291 = vor.u32 %v290, %v286
      %v292 = vrot.slane %v291, 4
      %v294 = vshll.u32 %v186, 16
      %v296 = vrot.slane %v294, 5
      %v297 = vsel %vm273, %v292, %v296
      %v299 = vshrl.u32 %v187, 16
      %v301 = vrot.slane %v299, 4
      %v302 = vshll.u32 %v187, 16
      %v304 = vrot.slane %v302, 5
      %v305 = vor.u32 %v301, %v304
      %v306 = vrot.slane %v305, 4
      %v308 = vshll.u32 %v188, 16
      %v310 = vrot.slane %v308, 5
      %v311 = vsel %vm273, %v306, %v310
      %v312 = vshrl.u32 %v188, 16
      %v314 = vrot.slane %v312, 4
      %v315 = vor.u32 %v314, %v310
      %v316 = vrot.slane %v315, 4
      %v318 = vshll.u32 %v189, 16
      %v320 = vrot.slane %v318, 5
      %v321 = vsel %vm273, %v316, %v320
      %v323 = vshrl.u32 %v190, 16
      %v325 = vrot.slane %v323, 4
      %v326 = vshll.u32 %v190, 16
      %v328 = vrot.slane %v326, 5
      %v329 = vor.u32 %v325, %v328
      %v330 = vrot.slane %v329, 4
      %v332 = vshll.u32 %v191, 16
      %v334 = vrot.slane %v332, 5
      %v335 = vsel %vm273, %v330, %v334
      %v336 = vshrl.u32 %v191, 16
      %v338 = vrot.slane %v336, 4
      %v339 = vor.u32 %v338, %v334
      %v340 = vrot.slane %v339, 4
      %v342 = vshll.u32 %v192, 16
      %v344 = vrot.slane %v342, 5
      %v345 = vsel %vm273, %v340, %v344
      %v347 = vshrl.u32 %v193, 16
      %v349 = vrot.slane %v347, 4
      %v350 = vshll.u32 %v193, 16
      %v352 = vrot.slane %v350, 5
      %v353 = vor.u32 %v349, %v352
      %v354 = vrot.slane %v353, 4
      %v356 = vshll.u32 %v194, 16
      %v358 = vrot.slane %v356, 5
      %v359 = vsel %vm273, %v354, %v358
      %v360 = vshrl.u32 %v194, 16
      %v362 = vrot.slane %v360, 4
      %v363 = vor.u32 %v362, %v358
      %v364 = vrot.slane %v363, 4
      %v366 = vshll.u32 %v195, 16
      %v368 = vrot.slane %v366, 5
      %v369 = vsel %vm273, %v364, %v368
      %v371 = vshrl.u32 %v196, 16
      %v373 = vrot.slane %v371, 4
      %v374 = vshll.u32 %v196, 16
      %v376 = vrot.slane %v374, 5
      %v377 = vor.u32 %v373, %v376
      %v378 = vrot.slane %v377, 4
      %v380 = vshll.u32 %v197, 16
      %v382 = vrot.slane %v380, 5
      %v383 = vsel %vm273, %v378, %v382
      %v384 = vshrl.u32 %v197, 16
      %v386 = vrot.slane %v384, 4
      %v387 = vor.u32 %v386, %v382
      %v388 = vrot.slane %v387, 4
      %v390 = vshll.u32 %v198, 16
      %v392 = vrot.slane %v390, 5
      %v393 = vsel %vm273, %v388, %v392
      %v395 = vshrl.u32 %v199, 16
      %v397 = vrot.slane %v395, 4
      %v398 = vshll.u32 %v199, 16
      %v400 = vrot.slane %v398, 5
      %v401 = vor.u32 %v397, %v400
      %v402 = vrot.slane %v401, 4
      %v404 = vshll.u32 %v200, 16
      %v406 = vrot.slane %v404, 5
      %v407 = vsel %vm273, %v402, %v406
      %v408 = vshrl.u32 %v200, 16
      %v410 = vrot.slane %v408, 4
      %v411 = vor.u32 %v410, %v406
      %v412 = vrot.slane %v411, 4
      %v414 = vshll.u32 %v201, 16
      %v416 = vrot.slane %v414, 5
      %v417 = vsel %vm273, %v412, %v416
      %v419 = vshrl.u32 %v202, 16
      %v421 = vrot.slane %v419, 4
      %v422 = vshll.u32 %v202, 16
      %v424 = vrot.slane %v422, 5
      %v425 = vor.u32 %v421, %v424
      %v426 = vrot.slane %v425, 4
      %v428 = vshll.u32 %v203, 16
      %v430 = vrot.slane %v428, 5
      %v431 = vsel %vm273, %v426, %v430
      %v432 = vshrl.u32 %v203, 16
      %v434 = vrot.slane %v432, 4
      %v435 = vor.u32 %v434, %v430
      %v436 = vrot.slane %v435, 4
      %v438 = vshll.u32 %v204, 16
      %v440 = vrot.slane %v438, 5
      %v441 = vsel %vm273, %v436, %v440
      %v443 = vshrl.u32 %v205, 16
      %v445 = vrot.slane %v443, 4
      %v446 = vshll.u32 %v205, 16
      %v448 = vrot.slane %v446, 5
      %v449 = vor.u32 %v445, %v448
      %v450 = vrot.slane %v449, 4
      %v452 = vshll.u32 %v206, 16
      %v454 = vrot.slane %v452, 5
      %v455 = vsel %vm273, %v450, %v454
      %v456 = vshrl.u32 %v206, 16
      %v458 = vrot.slane %v456, 4
      %v459 = vor.u32 %v458, %v454
      %v460 = vrot.slane %v459, 4
      %v462 = vshll.u32 %v207, 16
      %v464 = vrot.slane %v462, 5
      %v465 = vsel %vm273, %v460, %v464
      %v466 = vunpack.c.l.b16 %v287
      %v467 = vunpack.c.l.b16 %v297
      %v468 = vunpack.c.l.b16 %v311
      %v469 = vunpack.c.l.b16 %v321
      %v470 = vunpack.c.l.b16 %v335
      %v471 = vunpack.c.l.b16 %v345
      %v472 = vunpack.c.l.b16 %v359
      %v473 = vunpack.c.l.b16 %v369
      %v474 = vunpack.c.l.b16 %v383
      %v475 = vunpack.c.l.b16 %v393
      %v476 = vunpack.c.l.b16 %v407
      %v477 = vunpack.c.l.b16 %v417
      %v478 = vunpack.c.l.b16 %v431
      %v479 = vunpack.c.l.b16 %v441
      %v480 = vunpack.c.l.b16 %v455
      %v481 = vunpack.c.l.b16 %v465
      %v482 = vpack.c.b16 %v467, %v466
      %v483 = vpack.c.b16 %v469, %v468
      %v484 = vpack.c.b16 %v471, %v470
      %v485 = vpack.c.b16 %v473, %v472
      %v486 = vpack.c.b16 %v475, %v474
      %v487 = vpack.c.b16 %v477, %v476
      %v488 = vpack.c.b16 %v479, %v478
      %v489 = vpack.c.b16 %v481, %v480
      %490 = vrot.lane.b32.xlu0 %v482, 64
      %v491 = vpop.permute.xlu0 %490
      %492 = vrot.lane.b32.xlu0 %v483, 64
      %v493 = vpop.permute.xlu0 %492
      %494 = vrot.lane.b32.xlu0 %v484, 64
      %v495 = vpop.permute.xlu0 %494
      %496 = vrot.lane.b32.xlu0 %v485, 64
      %v497 = vpop.permute.xlu0 %496
      %498 = vrot.lane.b32.xlu0 %v486, 64
      %v499 = vpop.permute.xlu0 %498
      %500 = vrot.lane.b32.xlu0 %v487, 64
      %v501 = vpop.permute.xlu0 %500
      %502 = vrot.lane.b32.xlu0 %v488, 64
      %v503 = vpop.permute.xlu0 %502
      %504 = vrot.lane.b32.xlu0 %v489, 64
      %v505 = vpop.permute.xlu0 %504
      %vm514 = vcmask 1048064
      %515 = vst.msk [vmem:[#allocation2] sm:$0xff] %vm514, %v491
      %516 = vst.msk [vmem:[#allocation2 + $0x28] sm:$0xff] %vm514, %v493
      %517 = vst.msk [vmem:[#allocation2 + $0x50] sm:$0xff] %vm514, %v495
      %518 = vst.msk [vmem:[#allocation2 + $0x78] sm:$0xff] %vm514, %v497
      %519 = vst.msk [vmem:[#allocation2 + $0xa0] sm:$0xff] %vm514, %v499
      %520 = vst.msk [vmem:[#allocation2 + $0xc8] sm:$0xff] %vm514, %v501
      %521 = vst.msk [vmem:[#allocation2 + $0xf0] sm:$0xff] %vm514, %v503
      %522 = vst.msk [vmem:[#allocation2 + $0x118] sm:$0xff] %vm514, %v505
      %vm531 = vcmask 1042432
      %vm532 = vcmask 1046532
      %vm533 = vmor %vm531, %vm532
      %v534 = vrot.slane %v184, 5
      %v535 = vrot.slane %v534, 4
      %v536 = vrot.slane %v185, 5
      %v537 = vsel %vm533, %v535, %v536
      %v538 = vrot.slane %v536, 4
      %v539 = vrot.slane %v186, 5
      %v540 = vsel %vm533, %v538, %v539
      %v541 = vrot.slane %v187, 5
      %v542 = vrot.slane %v541, 4
      %v543 = vrot.slane %v188, 5
      %v544 = vsel %vm533, %v542, %v543
      %v545 = vrot.slane %v543, 4
      %v546 = vrot.slane %v189, 5
      %v547 = vsel %vm533, %v545, %v546
      %v548 = vrot.slane %v190, 5
      %v549 = vrot.slane %v548, 4
      %v550 = vrot.slane %v191, 5
      %v551 = vsel %vm533, %v549, %v550
      %v552 = vrot.slane %v550, 4
      %v553 = vrot.slane %v192, 5
      %v554 = vsel %vm533, %v552, %v553
      %v555 = vrot.slane %v193, 5
      %v556 = vrot.slane %v555, 4
      %v557 = vrot.slane %v194, 5
      %v558 = vsel %vm533, %v556, %v557
      %v559 = vrot.slane %v557, 4
      %v560 = vrot.slane %v195, 5
      %v561 = vsel %vm533, %v559, %v560
      %v562 = vrot.slane %v196, 5
      %v563 = vrot.slane %v562, 4
      %v564 = vrot.slane %v197, 5
      %v565 = vsel %vm533, %v563, %v564
      %v566 = vrot.slane %v564, 4
      %v567 = vrot.slane %v198, 5
      %v568 = vsel %vm533, %v566, %v567
      %v569 = vrot.slane %v199, 5
      %v570 = vrot.slane %v569, 4
      %v571 = vrot.slane %v200, 5
      %v572 = vsel %vm533, %v570, %v571
      %v573 = vrot.slane %v571, 4
      %v574 = vrot.slane %v201, 5
      %v575 = vsel %vm533, %v573, %v574
      %v576 = vrot.slane %v202, 5
      %v577 = vrot.slane %v576, 4
      %v578 = vrot.slane %v203, 5
      %v579 = vsel %vm533, %v577, %v578
      %v580 = vrot.slane %v578, 4
      %v581 = vrot.slane %v204, 5
      %v582 = vsel %vm533, %v580, %v581
      %v583 = vrot.slane %v205, 5
      %v584 = vrot.slane %v583, 4
      %v585 = vrot.slane %v206, 5
      %v586 = vsel %vm533, %v584, %v585
      %v587 = vrot.slane %v585, 4
      %v588 = vrot.slane %v207, 5
      %v589 = vsel %vm533, %v587, %v588
      %v590 = vunpack.c.l.b16 %v537
      %v591 = vunpack.c.l.b16 %v540
      %v592 = vunpack.c.l.b16 %v544
      %v593 = vunpack.c.l.b16 %v547
      %v594 = vunpack.c.l.b16 %v551
      %v595 = vunpack.c.l.b16 %v554
      %v596 = vunpack.c.l.b16 %v558
      %v597 = vunpack.c.l.b16 %v561
      %v598 = vunpack.c.l.b16 %v565
      %v599 = vunpack.c.l.b16 %v568
      %v600 = vunpack.c.l.b16 %v572
      %v601 = vunpack.c.l.b16 %v575
      %v602 = vunpack.c.l.b16 %v579
      %v603 = vunpack.c.l.b16 %v582
      %v604 = vunpack.c.l.b16 %v586
      %v605 = vunpack.c.l.b16 %v589
      %v606 = vpack.c.b16 %v591, %v590
      %v607 = vpack.c.b16 %v593, %v592
      %v608 = vpack.c.b16 %v595, %v594
      %v609 = vpack.c.b16 %v597, %v596
      %v610 = vpack.c.b16 %v599, %v598
      %v611 = vpack.c.b16 %v601, %v600
      %v612 = vpack.c.b16 %v603, %v602
      %v613 = vpack.c.b16 %v605, %v604
      %622 = vst.msk [vmem:[#allocation2 + $0x8] sm:$0xff] %vm262, %v606
      %623 = vst.msk [vmem:[#allocation2 + $0x30] sm:$0xff] %vm262, %v607
      %624 = vst.msk [vmem:[#allocation2 + $0x58] sm:$0xff] %vm262, %v608
      %625 = vst.msk [vmem:[#allocation2 + $0x80] sm:$0xff] %vm262, %v609
      %626 = vst.msk [vmem:[#allocation2 + $0xa8] sm:$0xff] %vm262, %v610
      %627 = vst.msk [vmem:[#allocation2 + $0xd0] sm:$0xff] %vm262, %v611
      %628 = vst.msk [vmem:[#allocation2 + $0xf8] sm:$0xff] %vm262, %v612
      %629 = vst.msk [vmem:[#allocation2 + $0x120] sm:$0xff] %vm262, %v613
      %v632 = vunpack.c.l.b16 %v208
      %v633 = vunpack.c.l.b16 %v209
      %v634 = vpack.c.b16 %v633, %v632
      %635 = vrot.lane.b32.xlu0 %v247, 64
      %v636 = vpop.permute.xlu0 %635
      %637 = vrot.lane.b32.xlu0 %v248, 64
      %v638 = vpop.permute.xlu0 %637
      %639 = vrot.lane.b32.xlu0 %v249, 64
      %v640 = vpop.permute.xlu0 %639
      %641 = vrot.lane.b32.xlu0 %v250, 64
      %v642 = vpop.permute.xlu0 %641
      %643 = vrot.lane.b32.xlu0 %v251, 64
      %v644 = vpop.permute.xlu0 %643
      %645 = vrot.lane.b32.xlu0 %v252, 64
      %v646 = vpop.permute.xlu0 %645
      %647 = vrot.lane.b32.xlu0 %v253, 64
      %v648 = vpop.permute.xlu0 %647
      %649 = vrot.lane.b32.xlu0 %v634, 64
      %v650 = vpop.permute.xlu0 %649
      %659 = vst.msk [vmem:[#allocation2 + $0x8] sm:$0xff] %vm514, %v636
      %660 = vst.msk [vmem:[#allocation2 + $0x30] sm:$0xff] %vm514, %v638
      %661 = vst.msk [vmem:[#allocation2 + $0x58] sm:$0xff] %vm514, %v640
      %662 = vst.msk [vmem:[#allocation2 + $0x80] sm:$0xff] %vm514, %v642
      %663 = vst.msk [vmem:[#allocation2 + $0xa8] sm:$0xff] %vm514, %v644
      %664 = vst.msk [vmem:[#allocation2 + $0xd0] sm:$0xff] %vm514, %v646
      %665 = vst.msk [vmem:[#allocation2 + $0xf8] sm:$0xff] %vm514, %v648
      %666 = vst.msk [vmem:[#allocation2 + $0x120] sm:$0xff] %vm514, %v650
      %v668 = vshrl.u32 %v208, 16
      %v670 = vrot.slane %v668, 4
      %v671 = vshll.u32 %v208, 16
      %v673 = vrot.slane %v671, 5
      %v674 = vor.u32 %v670, %v673
      %v675 = vrot.slane %v674, 4
      %v677 = vshll.u32 %v209, 16
      %v679 = vrot.slane %v677, 5
      %v680 = vsel %vm273, %v675, %v679
      %v681 = vshrl.u32 %v209, 16
      %v683 = vrot.slane %v681, 4
      %v684 = vor.u32 %v683, %v679
      %v685 = vrot.slane %v684, 4
      %v687 = vshll.u32 %v210, 16
      %v689 = vrot.slane %v687, 5
      %v690 = vsel %vm273, %v685, %v689
      %v691 = vunpack.c.l.b16 %v680
      %v692 = vunpack.c.l.b16 %v690
      %v693 = vpack.c.b16 %v692, %v691
      %702 = vst.msk [vmem:[#allocation2 + $0x10] sm:$0xff] %vm262, %v483
      %703 = vst.msk [vmem:[#allocation2 + $0x38] sm:$0xff] %vm262, %v484
      %704 = vst.msk [vmem:[#allocation2 + $0x60] sm:$0xff] %vm262, %v485
      %705 = vst.msk [vmem:[#allocation2 + $0x88] sm:$0xff] %vm262, %v486
      %706 = vst.msk [vmem:[#allocation2 + $0xb0] sm:$0xff] %vm262, %v487
      %707 = vst.msk [vmem:[#allocation2 + $0xd8] sm:$0xff] %vm262, %v488
      %708 = vst.msk [vmem:[#allocation2 + $0x100] sm:$0xff] %vm262, %v489
      %709 = vst.msk [vmem:[#allocation2 + $0x128] sm:$0xff] %vm262, %v693
      %v711 = vrot.slane %v208, 5
      %v712 = vrot.slane %v711, 4
      %v713 = vrot.slane %v209, 5
      %v714 = vsel %vm533, %v712, %v713
      %v715 = vrot.slane %v713, 4
      %v716 = vrot.slane %v210, 5
      %v717 = vsel %vm533, %v715, %v716
      %v718 = vunpack.c.l.b16 %v714
      %v719 = vunpack.c.l.b16 %v717
      %v720 = vpack.c.b16 %v719, %v718
      %721 = vrot.lane.b32.xlu0 %v607, 64
      %v722 = vpop.permute.xlu0 %721
      %723 = vrot.lane.b32.xlu0 %v608, 64
      %v724 = vpop.permute.xlu0 %723
      %725 = vrot.lane.b32.xlu0 %v609, 64
      %v726 = vpop.permute.xlu0 %725
      %727 = vrot.lane.b32.xlu0 %v610, 64
      %v728 = vpop.permute.xlu0 %727
      %729 = vrot.lane.b32.xlu0 %v611, 64
      %v730 = vpop.permute.xlu0 %729
      %731 = vrot.lane.b32.xlu0 %v612, 64
      %v732 = vpop.permute.xlu0 %731
      %733 = vrot.lane.b32.xlu0 %v613, 64
      %v734 = vpop.permute.xlu0 %733
      %735 = vrot.lane.b32.xlu0 %v720, 64
      %v736 = vpop.permute.xlu0 %735
      %745 = vst.msk [vmem:[#allocation2 + $0x10] sm:$0xff] %vm514, %v722
      %746 = vst.msk [vmem:[#allocation2 + $0x38] sm:$0xff] %vm514, %v724
      %747 = vst.msk [vmem:[#allocation2 + $0x60] sm:$0xff] %vm514, %v726
      %748 = vst.msk [vmem:[#allocation2 + $0x88] sm:$0xff] %vm514, %v728
      %749 = vst.msk [vmem:[#allocation2 + $0xb0] sm:$0xff] %vm514, %v730
      %750 = vst.msk [vmem:[#allocation2 + $0xd8] sm:$0xff] %vm514, %v732
      %751 = vst.msk [vmem:[#allocation2 + $0x100] sm:$0xff] %vm514, %v734
      %752 = vst.msk [vmem:[#allocation2 + $0x128] sm:$0xff] %vm514, %v736
      %v755 = vunpack.c.l.b16 %v211
      %v756 = vunpack.c.l.b16 %v212
      %v757 = vpack.c.b16 %v756, %v755
      %760 = vst.msk [vmem:[#allocation2 + $0x18] sm:$0xff] %vm262, %v248
      %761 = vst.msk [vmem:[#allocation2 + $0x40] sm:$0xff] %vm262, %v249
      %762 = vst.msk [vmem:[#allocation2 + $0x68] sm:$0xff] %vm262, %v250
      %763 = vst.msk [vmem:[#allocation2 + $0x90] sm:$0xff] %vm262, %v251
      %764 = vst.msk [vmem:[#allocation2 + $0xb8] sm:$0xff] %vm262, %v252
      %765 = vst.msk [vmem:[#allocation2 + $0xe0] sm:$0xff] %vm262, %v253
      %766 = vst.msk [vmem:[#allocation2 + $0x108] sm:$0xff] %vm262, %v634
      %767 = vst.msk [vmem:[#allocation2 + $0x130] sm:$0xff] %vm262, %v757
      %v769 = vshrl.u32 %v211, 16
      %v771 = vrot.slane %v769, 4
      %v772 = vshll.u32 %v211, 16
      %v774 = vrot.slane %v772, 5
      %v775 = vor.u32 %v771, %v774
      %v776 = vrot.slane %v775, 4
      %v778 = vshll.u32 %v212, 16
      %v780 = vrot.slane %v778, 5
      %v781 = vsel %vm273, %v776, %v780
      %v782 = vshrl.u32 %v212, 16
      %v784 = vrot.slane %v782, 4
      %v785 = vor.u32 %v784, %v780
      %v786 = vrot.slane %v785, 4
      %v788 = vshll.u32 %v213, 16
      %v790 = vrot.slane %v788, 5
      %v791 = vsel %vm273, %v786, %v790
      %v792 = vunpack.c.l.b16 %v781
      %v793 = vunpack.c.l.b16 %v791
      %v794 = vpack.c.b16 %v793, %v792
      %795 = vrot.lane.b32.xlu0 %v693, 64
      %v796 = vpop.permute.xlu0 %795
      %797 = vrot.lane.b32.xlu0 %v794, 64
      %v798 = vpop.permute.xlu0 %797
      %801 = vst.msk [vmem:[#allocation2 + $0x18] sm:$0xff] %vm514, %v495
      %802 = vst.msk [vmem:[#allocation2 + $0x40] sm:$0xff] %vm514, %v497
      %803 = vst.msk [vmem:[#allocation2 + $0x68] sm:$0xff] %vm514, %v499
      %804 = vst.msk [vmem:[#allocation2 + $0x90] sm:$0xff] %vm514, %v501
      %805 = vst.msk [vmem:[#allocation2 + $0xb8] sm:$0xff] %vm514, %v503
      %806 = vst.msk [vmem:[#allocation2 + $0xe0] sm:$0xff] %vm514, %v505
      %807 = vst.msk [vmem:[#allocation2 + $0x108] sm:$0xff] %vm514, %v796
      %808 = vst.msk [vmem:[#allocation2 + $0x130] sm:$0xff] %vm514, %v798
      %v810 = vrot.slane %v211, 5
      %v811 = vrot.slane %v810, 4
      %v812 = vrot.slane %v212, 5
      %v813 = vsel %vm533, %v811, %v812
      %v814 = vrot.slane %v812, 4
      %v815 = vrot.slane %v213, 5
      %v816 = vsel %vm533, %v814, %v815
      %v817 = vunpack.c.l.b16 %v813
      %v818 = vunpack.c.l.b16 %v816
      %v819 = vpack.c.b16 %v818, %v817
      %822 = vst.msk [vmem:[#allocation2 + $0x20] sm:$0xff] %vm262, %v608
      %823 = vst.msk [vmem:[#allocation2 + $0x48] sm:$0xff] %vm262, %v609
      %824 = vst.msk [vmem:[#allocation2 + $0x70] sm:$0xff] %vm262, %v610
      %825 = vst.msk [vmem:[#allocation2 + $0x98] sm:$0xff] %vm262, %v611
      %826 = vst.msk [vmem:[#allocation2 + $0xc0] sm:$0xff] %vm262, %v612
      %827 = vst.msk [vmem:[#allocation2 + $0xe8] sm:$0xff] %vm262, %v613
      %828 = vst.msk [vmem:[#allocation2 + $0x110] sm:$0xff] %vm262, %v720
      %829 = vst.msk [vmem:[#allocation2 + $0x138] sm:$0xff] %vm262, %v819
      %v830 = vld [vmem:[#allocation2] sm:$0xff]
      %v831 = vld [vmem:[#allocation2 + $0x8] sm:$0xff]
      %v832 = vld [vmem:[#allocation2 + $0x10] sm:$0xff]
      %v833 = vld [vmem:[#allocation2 + $0x18] sm:$0xff]
      %v834 = vld [vmem:[#allocation2 + $0x20] sm:$0xff]
      %v835 = vld [vmem:[#allocation2 + $0x28] sm:$0xff]
      %v836 = vld [vmem:[#allocation2 + $0x30] sm:$0xff]
      %v837 = vld [vmem:[#allocation2 + $0x38] sm:$0xff]
      %v838 = vld [vmem:[#allocation2 + $0x40] sm:$0xff]
      %v839 = vld [vmem:[#allocation2 + $0x48] sm:$0xff]
      %v840 = vld [vmem:[#allocation2 + $0x50] sm:$0xff]
      %v841 = vld [vmem:[#allocation2 + $0x58] sm:$0xff]
      %v842 = vld [vmem:[#allocation2 + $0x60] sm:$0xff]
      %v843 = vld [vmem:[#allocation2 + $0x68] sm:$0xff]
      %v844 = vld [vmem:[#allocation2 + $0x70] sm:$0xff]
      %v845 = vld [vmem:[#allocation2 + $0x78] sm:$0xff]
      %v846 = vld [vmem:[#allocation2 + $0x80] sm:$0xff]
      %v847 = vld [vmem:[#allocation2 + $0x88] sm:$0xff]
      %v848 = vld [vmem:[#allocation2 + $0x90] sm:$0xff]
      %v849 = vld [vmem:[#allocation2 + $0x98] sm:$0xff]
      %v850 = vld [vmem:[#allocation2 + $0xa0] sm:$0xff]
      %v851 = vld [vmem:[#allocation2 + $0xa8] sm:$0xff]
      %v852 = vld [vmem:[#allocation2 + $0xb0] sm:$0xff]
      %v853 = vld [vmem:[#allocation2 + $0xb8] sm:$0xff]
      %v854 = vld [vmem:[#allocation2 + $0xc0] sm:$0xff]
      %v855 = vld [vmem:[#allocation2 + $0xc8] sm:$0xff]
      %v856 = vld [vmem:[#allocation2 + $0xd0] sm:$0xff]
      %v857 = vld [vmem:[#allocation2 + $0xd8] sm:$0xff]
      %v858 = vld [vmem:[#allocation2 + $0xe0] sm:$0xff]
      %v859 = vld [vmem:[#allocation2 + $0xe8] sm:$0xff]
      %v860 = vld [vmem:[#allocation2 + $0xf0] sm:$0xff]
      %v861 = vld [vmem:[#allocation2 + $0xf8] sm:$0xff]
      %v862 = vld [vmem:[#allocation2 + $0x100] sm:$0xff]
      %v863 = vld [vmem:[#allocation2 + $0x108] sm:$0xff]
      %v864 = vld [vmem:[#allocation2 + $0x110] sm:$0xff]
      %v865 = vld [vmem:[#allocation2 + $0x118] sm:$0xff]
      %v866 = vld [vmem:[#allocation2 + $0x120] sm:$0xff]
      %v867 = vld [vmem:[#allocation2 + $0x128] sm:$0xff]
      %v868 = vld [vmem:[#allocation2 + $0x130] sm:$0xff]
      %v869 = vld [vmem:[#allocation2 + $0x138] sm:$0xff]
      %v870 = vld [vmem:[%s1] sm:$0xf]
      %v871 = vld [vmem:[%s1 + $0x4] sm:$0xf]
      %v872 = vld [vmem:[%s1 + $0x8] sm:$0xf]
      %v873 = vld [vmem:[%s1 + $0xc] sm:$0xf]
      %v874 = vld [vmem:[%s1 + $0x10] sm:$0xf]
      %v875 = vld [vmem:[%s1 + $0x14] sm:$0xf]
      %v876 = vld [vmem:[%s1 + $0x18] sm:$0xf]
      %v877 = vld [vmem:[%s1 + $0x1c] sm:$0xf]
      %v878 = vld [vmem:[%s1 + $0x20] sm:$0xf]
      %v879 = vld [vmem:[%s1 + $0x24] sm:$0xf]
      %v880 = vld [vmem:[%s1 + $0x28] sm:$0xf]
      %v881 = vld [vmem:[%s1 + $0x2c] sm:$0xf]
      %v882 = vld [vmem:[%s1 + $0x30] sm:$0xf]
      %v883 = vld [vmem:[%s1 + $0x34] sm:$0xf]
      %v884 = vld [vmem:[%s1 + $0x38] sm:$0xf]
      %v885 = vld [vmem:[%s1 + $0x3c] sm:$0xf]
      %v886 = vld [vmem:[%s1 + $0x40] sm:$0xf]
      %v887 = vld [vmem:[%s1 + $0x44] sm:$0xf]
      %v888 = vld [vmem:[%s1 + $0x48] sm:$0xf]
      %v889 = vld [vmem:[%s1 + $0x4c] sm:$0xf]
      %v890 = vld [vmem:[%s1 + $0x50] sm:$0xf]
      %v891 = vld [vmem:[%s1 + $0x54] sm:$0xf]
      %v892 = vld [vmem:[%s1 + $0x58] sm:$0xf]
      %v893 = vld [vmem:[%s1 + $0x5c] sm:$0xf]
      %v894 = vld [vmem:[%s1 + $0x60] sm:$0xf]
      %v895 = vld [vmem:[%s1 + $0x64] sm:$0xf]
      %v896 = vld [vmem:[%s1 + $0x68] sm:$0xf]
      %v897 = vld [vmem:[%s1 + $0x6c] sm:$0xf]
      %v898 = vld [vmem:[%s1 + $0x70] sm:$0xf]
      %v899 = vld [vmem:[%s1 + $0x74] sm:$0xf]
      %v900 = vld [vmem:[%s1 + $0x78] sm:$0xf]
      %v901 = vld [vmem:[%s1 + $0x7c] sm:$0xf]
      %v902 = vld [vmem:[%s1 + $0x80] sm:$0xf]
      %v903 = vld [vmem:[%s1 + $0x84] sm:$0xf]
      %v904 = vld [vmem:[%s1 + $0x88] sm:$0xf]
      %v905 = vld [vmem:[%s1 + $0x8c] sm:$0xf]
      %v906 = vld [vmem:[%s1 + $0x90] sm:$0xf]
      %v907 = vld [vmem:[%s1 + $0x94] sm:$0xf]
      %v908 = vld [vmem:[%s1 + $0x98] sm:$0xf]
      %v909 = vld [vmem:[%s1 + $0x9c] sm:$0xf]
      %v910 = vld [vmem:[%s1 + $0xa0] sm:$0xf]
      %v911 = vld [vmem:[%s1 + $0xa4] sm:$0xf]
      %v912 = vld [vmem:[%s1 + $0xa8] sm:$0xf]
      %v913 = vld [vmem:[%s1 + $0xac] sm:$0xf]
      %v914 = vld [vmem:[%s1 + $0xb0] sm:$0xf]
      %v915 = vld [vmem:[%s1 + $0xb4] sm:$0xf]
      %v916 = vld [vmem:[%s1 + $0xb8] sm:$0xf]
      %v917 = vld [vmem:[%s1 + $0xbc] sm:$0xf]
      %v918 = vld [vmem:[%s1 + $0xc0] sm:$0xf]
      %v919 = vld [vmem:[%s1 + $0xc4] sm:$0xf]
      %v920 = vld [vmem:[%s1 + $0xc8] sm:$0xf]
      %v921 = vld [vmem:[%s1 + $0xcc] sm:$0xf]
      %v922 = vld [vmem:[%s1 + $0xd0] sm:$0xf]
      %v923 = vld [vmem:[%s1 + $0xd4] sm:$0xf]
      %v924 = vld [vmem:[%s1 + $0xd8] sm:$0xf]
      %v925 = vld [vmem:[%s1 + $0xdc] sm:$0xf]
      %v926 = vld [vmem:[%s1 + $0xe0] sm:$0xf]
      %v927 = vld [vmem:[%s1 + $0xe4] sm:$0xf]
      %v928 = vld [vmem:[%s1 + $0xe8] sm:$0xf]
      %v929 = vld [vmem:[%s1 + $0xec] sm:$0xf]
      %v930 = vld [vmem:[%s1 + $0xf0] sm:$0xf]
      %v931 = vld [vmem:[%s1 + $0xf4] sm:$0xf]
      %v932 = vld [vmem:[%s1 + $0xf8] sm:$0xf]
      %v933 = vld [vmem:[%s1 + $0xfc] sm:$0xf]
      %v934 = vld [vmem:[%s1 + $0x100] sm:$0xf]
      %v935 = vld [vmem:[%s1 + $0x104] sm:$0xf]
      %v936 = vld [vmem:[%s1 + $0x108] sm:$0xf]
      %v937 = vld [vmem:[%s1 + $0x10c] sm:$0xf]
      %v938 = vld [vmem:[%s1 + $0x110] sm:$0xf]
      %v939 = vld [vmem:[%s1 + $0x114] sm:$0xf]
      %v940 = vld [vmem:[%s1 + $0x118] sm:$0xf]
      %v941 = vld [vmem:[%s1 + $0x11c] sm:$0xf]
      %v1014 = vunpack.c.l.b16 %v870
      %v1015 = vunpack.c.l.b16 %v871
      %v1016 = vunpack.c.l.b16 %v872
      %v1017 = vunpack.c.l.b16 %v873
      %v1018 = vunpack.c.l.b16 %v874
      %v1019 = vunpack.c.l.b16 %v875
      %v1020 = vunpack.c.l.b16 %v876
      %v1021 = vunpack.c.l.b16 %v877
      %v1022 = vunpack.c.l.b16 %v878
      %v1023 = vunpack.c.l.b16 %v879
      %v1024 = vunpack.c.l.b16 %v880
      %v1025 = vunpack.c.l.b16 %v881
      %v1026 = vunpack.c.l.b16 %v882
      %v1027 = vunpack.c.l.b16 %v883
      %v1028 = vunpack.c.l.b16 %v884
      %v1029 = vunpack.c.l.b16 %v885
      %v1030 = vunpack.c.l.b16 %v886
      %v1031 = vunpack.c.l.b16 %v887
      %v1032 = vunpack.c.l.b16 %v888
      %v1033 = vunpack.c.l.b16 %v889
      %v1034 = vunpack.c.l.b16 %v890
      %v1035 = vunpack.c.l.b16 %v891
      %v1036 = vunpack.c.l.b16 %v892
      %v1037 = vunpack.c.l.b16 %v893
      %v1038 = vunpack.c.l.b16 %v894
      %v1039 = vunpack.c.l.b16 %v895
      %v1040 = vunpack.c.l.b16 %v896
      %v1041 = vunpack.c.l.b16 %v897
      %v1042 = vunpack.c.l.b16 %v898
      %v1043 = vunpack.c.l.b16 %v899
      %v1044 = vunpack.c.l.b16 %v900
      %v1045 = vunpack.c.l.b16 %v901
      %v1046 = vunpack.c.l.b16 %v902
      %v1047 = vunpack.c.l.b16 %v903
      %v1048 = vunpack.c.l.b16 %v904
      %v1049 = vunpack.c.l.b16 %v905
      %v1050 = vunpack.c.l.b16 %v906
      %v1051 = vunpack.c.l.b16 %v907
      %v1052 = vunpack.c.l.b16 %v908
      %v1053 = vunpack.c.l.b16 %v909
      %v1054 = vunpack.c.l.b16 %v910
      %v1055 = vunpack.c.l.b16 %v911
      %v1056 = vunpack.c.l.b16 %v912
      %v1057 = vunpack.c.l.b16 %v913
      %v1058 = vunpack.c.l.b16 %v914
      %v1059 = vunpack.c.l.b16 %v915
      %v1060 = vunpack.c.l.b16 %v916
      %v1061 = vunpack.c.l.b16 %v917
      %v1062 = vunpack.c.l.b16 %v918
      %v1063 = vunpack.c.l.b16 %v919
      %v1064 = vunpack.c.l.b16 %v920
      %v1065 = vunpack.c.l.b16 %v921
      %v1066 = vunpack.c.l.b16 %v922
      %v1067 = vunpack.c.l.b16 %v923
      %v1068 = vunpack.c.l.b16 %v924
      %v1069 = vunpack.c.l.b16 %v925
      %v1070 = vunpack.c.l.b16 %v926
      %v1071 = vunpack.c.l.b16 %v927
      %v1072 = vunpack.c.l.b16 %v928
      %v1073 = vunpack.c.l.b16 %v929
      %v1074 = vunpack.c.l.b16 %v930
      %v1075 = vunpack.c.l.b16 %v931
      %v1076 = vunpack.c.l.b16 %v932
      %v1077 = vunpack.c.l.b16 %v933
      %v1078 = vunpack.c.l.b16 %v934
      %v1079 = vunpack.c.l.b16 %v935
      %v1080 = vunpack.c.l.b16 %v936
      %v1081 = vunpack.c.l.b16 %v937
      %v1082 = vunpack.c.l.b16 %v938
      %v1083 = vunpack.c.l.b16 %v939
      %v1084 = vunpack.c.l.b16 %v940
      %v1085 = vunpack.c.l.b16 %v941
      %v1086 = vpack.c.b16 %v1015, %v1014
      %v1087 = vpack.c.b16 %v1017, %v1016
      %v1088 = vpack.c.b16 %v1019, %v1018
      %v1089 = vpack.c.b16 %v1021, %v1020
      %v1090 = vpack.c.b16 %v1023, %v1022
      %v1091 = vpack.c.b16 %v1025, %v1024
      %v1092 = vpack.c.b16 %v1027, %v1026
      %v1093 = vpack.c.b16 %v1029, %v1028
      %v1094 = vpack.c.b16 %v1031, %v1030
      %v1095 = vpack.c.b16 %v1033, %v1032
      %v1096 = vpack.c.b16 %v1035, %v1034
      %v1097 = vpack.c.b16 %v1037, %v1036
      %v1098 = vpack.c.b16 %v1039, %v1038
      %v1099 = vpack.c.b16 %v1041, %v1040
      %v1100 = vpack.c.b16 %v1043, %v1042
      %v1101 = vpack.c.b16 %v1045, %v1044
      %v1102 = vpack.c.b16 %v1047, %v1046
      %v1103 = vpack.c.b16 %v1049, %v1048
      %v1104 = vpack.c.b16 %v1051, %v1050
      %v1105 = vpack.c.b16 %v1053, %v1052
      %v1106 = vpack.c.b16 %v1055, %v1054
      %v1107 = vpack.c.b16 %v1057, %v1056
      %v1108 = vpack.c.b16 %v1059, %v1058
      %v1109 = vpack.c.b16 %v1061, %v1060
      %v1110 = vpack.c.b16 %v1063, %v1062
      %v1111 = vpack.c.b16 %v1065, %v1064
      %v1112 = vpack.c.b16 %v1067, %v1066
      %v1113 = vpack.c.b16 %v1069, %v1068
      %v1114 = vpack.c.b16 %v1071, %v1070
      %v1115 = vpack.c.b16 %v1073, %v1072
      %v1116 = vpack.c.b16 %v1075, %v1074
      %v1117 = vpack.c.b16 %v1077, %v1076
      %v1118 = vpack.c.b16 %v1079, %v1078
      %v1119 = vpack.c.b16 %v1081, %v1080
      %v1120 = vpack.c.b16 %v1083, %v1082
      %v1121 = vpack.c.b16 %v1085, %v1084
      %v1159 = vsel %vm262, %v834, 0
      %v1162 = vsel %vm262, %v839, 0
      %v1165 = vsel %vm262, %v844, 0
      %v1168 = vsel %vm262, %v849, 0
      %v1171 = vsel %vm262, %v854, 0
      %v1174 = vsel %vm262, %v859, 0
      %v1177 = vsel %vm262, %v864, 0
      %v1180 = vsel %vm262, %v869, 0
      %1182 = vmatprep.subr.bf16.mxu0 0
      %1183 = vmatpush1.bf16.msra.mxu0 %v1086
      %1184 = vmatprep.subr.bf16.mxu0 0
      %1185 = vmatpush1.bf16.msra.mxu0 %v1087
      %1186 = vmatprep.subr.bf16.mxu0 0
      %1187 = vmatpush1.bf16.msra.mxu0 %v1088
      %1188 = vmatprep.subr.bf16.mxu0 0
      %1189 = vmatpush1.bf16.msra.mxu0 %v1089
      %1190 = vmatprep.subr.bf16.mxu0 0
      %1191 = vmatpush1.bf16.msra.mxu0 %v1090
      %1192 = vmatprep.subr.bf16.mxu0 0
      %1193 = vmatpush1.bf16.msra.mxu0 %v1091
      %1194 = vmatprep.subr.bf16.mxu0 0
      %1195 = vmatpush1.bf16.msra.mxu0 %v1092
      %1196 = vmatprep.subr.bf16.mxu0 0
      %1197 = vmatpush1.bf16.msra.mxu0 %v1093
      %1198 = vmatprep.subr.bf16.mxu0 0
      %1199 = vmatpush1.bf16.msra.mxu0 %v1094
      %1200 = vmatprep.subr.bf16.mxu0 0
      %1201 = vmatpush1.bf16.msra.mxu0 %v1095
      %1202 = vmatprep.subr.bf16.mxu0 0
      %1203 = vmatpush1.bf16.msra.mxu0 %v1096
      %1204 = vmatprep.subr.bf16.mxu0 0
      %1205 = vmatpush1.bf16.msra.mxu0 %v1097
      %1206 = vmatprep.subr.bf16.mxu0 0
      %1207 = vmatpush1.bf16.msra.mxu0 %v1098
      %1208 = vmatprep.subr.bf16.mxu0 0
      %1209 = vmatpush1.bf16.msra.mxu0 %v1099
      %1210 = vmatprep.subr.bf16.mxu0 0
      %1211 = vmatpush1.bf16.msra.mxu0 %v1100
      %1212 = vmatprep.subr.bf16.mxu0 0
      %1213 = vmatpush1.bf16.msra.mxu0 %v1101
      %1214 = vmatprep.mubr.bf16.mxu0 %v831
      %1215 = vmatmul.mubr.bf16.gmra.mrb[0].mxu0 %v830
      %v1216 = vpop.f32.mrb[0].mxu0
      %v1217 = vadd.f32 0.0, %v1216
      %v1218 = vpop.f32.mrb[0].mxu0
      %v1219 = vpop.f32.mrb[0].mxu0
      %v1220 = vadd.f32 0.0, %v1219
      %v1221 = vpop.f32.mrb[0].mxu0
      %1222 = vmatprep.mubr.bf16.mxu0 %v836
      %1223 = vmatmul.mubr.bf16.gmra.mrb[0].mxu0 %v835
      %v1224 = vpop.f32.mrb[0].mxu0
      %v1225 = vadd.f32 0.0, %v1224
      %v1226 = vpop.f32.mrb[0].mxu0
      %v1227 = vpop.f32.mrb[0].mxu0
      %v1228 = vadd.f32 0.0, %v1227
      %v1229 = vpop.f32.mrb[0].mxu0
      %1230 = vmatprep.mubr.bf16.mxu0 %v841
      %1231 = vmatmul.mubr.bf16.gmra.mrb[0].mxu0 %v840
      %v1232 = vpop.f32.mrb[0].mxu0
      %v1233 = vadd.f32 0.0, %v1232
      %v1234 = vpop.f32.mrb[0].mxu0
      %v1235 = vpop.f32.mrb[0].mxu0
      %v1236 = vadd.f32 0.0, %v1235
      %v1237 = vpop.f32.mrb[0].mxu0
      %1238 = vmatprep.mubr.bf16.mxu0 %v846
      %1239 = vmatmul.mubr.bf16.gmra.mrb[0].mxu0 %v845
      %v1240 = vpop.f32.mrb[0].mxu0
      %v1241 = vadd.f32 0.0, %v1240
      %v1242 = vpop.f32.mrb[0].mxu0
      %v1243 = vpop.f32.mrb[0].mxu0
      %v1244 = vadd.f32 0.0, %v1243
      %v1245 = vpop.f32.mrb[0].mxu0
      %1246 = vmatprep.mubr.bf16.mxu0 %v851
      %1247 = vmatmul.mubr.bf16.gmra.mrb[0].mxu0 %v850
      %v1248 = vpop.f32.mrb[0].mxu0
      %v1249 = vadd.f32 0.0, %v1248
      %v1250 = vpop.f32.mrb[0].mxu0
      %v1251 = vpop.f32.mrb[0].mxu0
      %v1252 = vadd.f32 0.0, %v1251
      %v1253 = vpop.f32.mrb[0].mxu0
      %1254 = vmatprep.mubr.bf16.mxu0 %v856
      %1255 = vmatmul.mubr.bf16.gmra.mrb[0].mxu0 %v855
      %v1256 = vpop.f32.mrb[0].mxu0
      %v1257 = vadd.f32 0.0, %v1256
      %v1258 = vpop.f32.mrb[0].mxu0
      %v1259 = vpop.f32.mrb[0].mxu0
      %v1260 = vadd.f32 0.0, %v1259
      %v1261 = vpop.f32.mrb[0].mxu0
      %1262 = vmatprep.mubr.bf16.mxu0 %v861
      %1263 = vmatmul.mubr.bf16.gmra.mrb[0].mxu0 %v860
      %v1264 = vpop.f32.mrb[0].mxu0
      %v1265 = vadd.f32 0.0, %v1264
      %v1266 = vpop.f32.mrb[0].mxu0
      %v1267 = vpop.f32.mrb[0].mxu0
      %v1268 = vadd.f32 0.0, %v1267
      %v1269 = vpop.f32.mrb[0].mxu0
      %1270 = vmatprep.mubr.bf16.mxu0 %v866
      %1271 = vmatmul.mubr.bf16.gmra.mrb[0].mxu0 %v865
      %v1272 = vpop.f32.mrb[0].mxu0
      %v1273 = vadd.f32 0.0, %v1272
      %v1274 = vpop.f32.mrb[0].mxu0
      %v1275 = vpop.f32.mrb[0].mxu0
      %v1276 = vadd.f32 0.0, %v1275
      %v1277 = vpop.f32.mrb[0].mxu0
      %1278 = vdwg.mxu0
      %1279 = vmatprep.subr.bf16.mxu0 0
      %1280 = vmatpush1.bf16.msra.mxu0 %v1102
      %1281 = vmatprep.subr.bf16.mxu0 0
      %1282 = vmatpush1.bf16.msra.mxu0 %v1103
      %1283 = vmatprep.subr.bf16.mxu0 0
      %1284 = vmatpush1.bf16.msra.mxu0 %v1104
      %1285 = vmatprep.subr.bf16.mxu0 0
      %1286 = vmatpush1.bf16.msra.mxu0 %v1105
      %1287 = vmatprep.subr.bf16.mxu0 0
      %1288 = vmatpush1.bf16.msra.mxu0 %v1106
      %1289 = vmatprep.subr.bf16.mxu0 0
      %1290 = vmatpush1.bf16.msra.mxu0 %v1107
      %1291 = vmatprep.subr.bf16.mxu0 0
      %1292 = vmatpush1.bf16.msra.mxu0 %v1108
      %1293 = vmatprep.subr.bf16.mxu0 0
      %1294 = vmatpush1.bf16.msra.mxu0 %v1109
      %1295 = vmatprep.subr.bf16.mxu0 0
      %1296 = vmatpush1.bf16.msra.mxu0 %v1110
      %1297 = vmatprep.subr.bf16.mxu0 0
      %1298 = vmatpush1.bf16.msra.mxu0 %v1111
      %1299 = vmatprep.subr.bf16.mxu0 0
      %1300 = vmatpush1.bf16.msra.mxu0 %v1112
      %1301 = vmatprep.subr.bf16.mxu0 0
      %1302 = vmatpush1.bf16.msra.mxu0 %v1113
      %1303 = vmatprep.subr.bf16.mxu0 0
      %1304 = vmatpush1.bf16.msra.mxu0 %v1114
      %1305 = vmatprep.subr.bf16.mxu0 0
      %1306 = vmatpush1.bf16.msra.mxu0 %v1115
      %1307 = vmatprep.subr.bf16.mxu0 0
      %1308 = vmatpush1.bf16.msra.mxu0 %v1116
      %1309 = vmatprep.subr.bf16.mxu0 0
      %1310 = vmatpush1.bf16.msra.mxu0 %v1117
      %1311 = vmatprep.mubr.bf16.mxu0 %v833
      %1312 = vmatmul.mubr.bf16.gmra.mrb[0].mxu0 %v832
      %v1313 = vpop.f32.mrb[0].mxu0
      %v1314 = vadd.f32 %v1217, %v1313
      %v1315 = vpop.f32.mrb[0].mxu0
      %v1316 = vpop.f32.mrb[0].mxu0
      %v1317 = vadd.f32 %v1220, %v1316
      %v1318 = vpop.f32.mrb[0].mxu0
      %1319 = vmatprep.mubr.bf16.mxu0 %v838
      %1320 = vmatmul.mubr.bf16.gmra.mrb[0].mxu0 %v837
      %v1321 = vpop.f32.mrb[0].mxu0
      %v1322 = vadd.f32 %v1225, %v1321
      %v1323 = vpop.f32.mrb[0].mxu0
      %v1324 = vpop.f32.mrb[0].mxu0
      %v1325 = vadd.f32 %v1228, %v1324
      %v1326 = vpop.f32.mrb[0].mxu0
      %1327 = vmatprep.mubr.bf16.mxu0 %v843
      %1328 = vmatmul.mubr.bf16.gmra.mrb[0].mxu0 %v842
      %v1329 = vpop.f32.mrb[0].mxu0
      %v1330 = vadd.f32 %v1233, %v1329
      %v1331 = vpop.f32.mrb[0].mxu0
      %v1332 = vpop.f32.mrb[0].mxu0
      %v1333 = vadd.f32 %v1236, %v1332
      %v1334 = vpop.f32.mrb[0].mxu0
      %1335 = vmatprep.mubr.bf16.mxu0 %v848
      %1336 = vmatmul.mubr.bf16.gmra.mrb[0].mxu0 %v847
      %v1337 = vpop.f32.mrb[0].mxu0
      %v1338 = vadd.f32 %v1241, %v1337
      %v1339 = vpop.f32.mrb[0].mxu0
      %v1340 = vpop.f32.mrb[0].mxu0
      %v1341 = vadd.f32 %v1244, %v1340
      %v1342 = vpop.f32.mrb[0].mxu0
      %1343 = vmatprep.mubr.bf16.mxu0 %v853
      %1344 = vmatmul.mubr.bf16.gmra.mrb[0].mxu0 %v852
      %v1345 = vpop.f32.mrb[0].mxu0
      %v1346 = vadd.f32 %v1249, %v1345
      %v1347 = vpop.f32.mrb[0].mxu0
      %v1348 = vpop.f32.mrb[0].mxu0
      %v1349 = vadd.f32 %v1252, %v1348
      %v1350 = vpop.f32.mrb[0].mxu0
      %1351 = vmatprep.mubr.bf16.mxu0 %v858
      %1352 = vmatmul.mubr.bf16.gmra.mrb[0].mxu0 %v857
      %v1353 = vpop.f32.mrb[0].mxu0
      %v1354 = vadd.f32 %v1257, %v1353
      %v1355 = vpop.f32.mrb[0].mxu0
      %v1356 = vpop.f32.mrb[0].mxu0
      %v1357 = vadd.f32 %v1260, %v1356
      %v1358 = vpop.f32.mrb[0].mxu0
      %1359 = vmatprep.mubr.bf16.mxu0 %v863
      %1360 = vmatmul.mubr.bf16.gmra.mrb[0].mxu0 %v862
      %v1361 = vpop.f32.mrb[0].mxu0
      %v1362 = vadd.f32 %v1265, %v1361
      %v1363 = vpop.f32.mrb[0].mxu0
      %v1364 = vpop.f32.mrb[0].mxu0
      %v1365 = vadd.f32 %v1268, %v1364
      %v1366 = vpop.f32.mrb[0].mxu0
      %1367 = vmatprep.mubr.bf16.mxu0 %v868
      %1368 = vmatmul.mubr.bf16.gmra.mrb[0].mxu0 %v867
      %v1369 = vpop.f32.mrb[0].mxu0
      %v1370 = vadd.f32 %v1273, %v1369
      %v1371 = vpop.f32.mrb[0].mxu0
      %v1372 = vpop.f32.mrb[0].mxu0
      %v1373 = vadd.f32 %v1276, %v1372
      %v1374 = vpop.f32.mrb[0].mxu0
      %1375 = vdwg.mxu0
      %1376 = vmatprep.subr.bf16.mxu0 0
      %1377 = vmatpush1.bf16.msra.mxu0 %v1118
      %1378 = vmatprep.subr.bf16.mxu0 0
      %1379 = vmatpush1.bf16.msra.mxu0 %v1119
      %1380 = vmatprep.subr.bf16.mxu0 0
      %1381 = vmatpush1.bf16.msra.mxu0 %v1120
      %1382 = vmatprep.subr.bf16.mxu0 0
      %1383 = vmatpush1.bf16.msra.mxu0 %v1121
      %1384 = vmatprep.subr.bf16.mxu0 0
      %1385 = vmatpush1.bf16.msra.mxu0 0
      %1386 = vmatprep.subr.bf16.mxu0 0
      %1387 = vmatpush1.bf16.msra.mxu0 0
      %1388 = vmatprep.subr.bf16.mxu0 0
      %1389 = vmatpush1.bf16.msra.mxu0 0
      %1390 = vmatprep.subr.bf16.mxu0 0
      %1391 = vmatpush1.bf16.msra.mxu0 0
      %1392 = vmatprep.subr.bf16.mxu0 0
      %1393 = vmatpush1.bf16.msra.mxu0 0
      %1394 = vmatprep.subr.bf16.mxu0 0
      %1395 = vmatpush1.bf16.msra.mxu0 0
      %1396 = vmatprep.subr.bf16.mxu0 0
      %1397 = vmatpush1.bf16.msra.mxu0 0
      %1398 = vmatprep.subr.bf16.mxu0 0
      %1399 = vmatpush1.bf16.msra.mxu0 0
      %1400 = vmatprep.subr.bf16.mxu0 0
      %1401 = vmatpush1.bf16.msra.mxu0 0
      %1402 = vmatprep.subr.bf16.mxu0 0
      %1403 = vmatpush1.bf16.msra.mxu0 0
      %1404 = vmatprep.subr.bf16.mxu0 0
      %1405 = vmatpush1.bf16.msra.mxu0 0
      %1406 = vmatprep.subr.bf16.mxu0 0
      %1407 = vmatpush1.bf16.msra.mxu0 0
      %1408 = vmatprep.mubr.bf16.mxu0 0
      %1409 = vmatmul.mubr.bf16.gmra.mrb[0].mxu0 %v1159
      %v1410 = vpop.f32.mrb[0].mxu0
      %v1411 = vadd.f32 %v1314, %v1410
      %v1412 = vpop.f32.mrb[0].mxu0
      %v1413 = vpop.f32.mrb[0].mxu0
      %v1414 = vadd.f32 %v1317, %v1413
      %v1415 = vpop.f32.mrb[0].mxu0
      %1416 = vmatprep.mubr.bf16.mxu0 0
      %1417 = vmatmul.mubr.bf16.gmra.mrb[0].mxu0 %v1162
      %v1418 = vpop.f32.mrb[0].mxu0
      %v1419 = vadd.f32 %v1322, %v1418
      %v1420 = vpop.f32.mrb[0].mxu0
      %v1421 = vpop.f32.mrb[0].mxu0
      %v1422 = vadd.f32 %v1325, %v1421
      %v1423 = vpop.f32.mrb[0].mxu0
      %1424 = vmatprep.mubr.bf16.mxu0 0
      %1425 = vmatmul.mubr.bf16.gmra.mrb[0].mxu0 %v1165
      %v1426 = vpop.f32.mrb[0].mxu0
      %v1427 = vadd.f32 %v1330, %v1426
      %v1428 = vpop.f32.mrb[0].mxu0
      %v1429 = vpop.f32.mrb[0].mxu0
      %v1430 = vadd.f32 %v1333, %v1429
      %v1431 = vpop.f32.mrb[0].mxu0
      %1432 = vmatprep.mubr.bf16.mxu0 0
      %1433 = vmatmul.mubr.bf16.gmra.mrb[0].mxu0 %v1168
      %v1434 = vpop.f32.mrb[0].mxu0
      %v1435 = vadd.f32 %v1338, %v1434
      %v1436 = vpop.f32.mrb[0].mxu0
      %v1437 = vpop.f32.mrb[0].mxu0
      %v1438 = vadd.f32 %v1341, %v1437
      %v1439 = vpop.f32.mrb[0].mxu0
      %1440 = vmatprep.mubr.bf16.mxu0 0
      %1441 = vmatmul.mubr.bf16.gmra.mrb[0].mxu0 %v1171
      %v1442 = vpop.f32.mrb[0].mxu0
      %v1443 = vadd.f32 %v1346, %v1442
      %v1444 = vpop.f32.mrb[0].mxu0
      %v1445 = vpop.f32.mrb[0].mxu0
      %v1446 = vadd.f32 %v1349, %v1445
      %v1447 = vpop.f32.mrb[0].mxu0
      %1448 = vmatprep.mubr.bf16.mxu0 0
      %1449 = vmatmul.mubr.bf16.gmra.mrb[0].mxu0 %v1174
      %v1450 = vpop.f32.mrb[0].mxu0
      %v1451 = vadd.f32 %v1354, %v1450
      %v1452 = vpop.f32.mrb[0].mxu0
      %v1453 = vpop.f32.mrb[0].mxu0
      %v1454 = vadd.f32 %v1357, %v1453
      %v1455 = vpop.f32.mrb[0].mxu0
      %1456 = vmatprep.mubr.bf16.mxu0 0
      %1457 = vmatmul.mubr.bf16.gmra.mrb[0].mxu0 %v1177
      %v1458 = vpop.f32.mrb[0].mxu0
      %v1459 = vadd.f32 %v1362, %v1458
      %v1460 = vpop.f32.mrb[0].mxu0
      %v1461 = vpop.f32.mrb[0].mxu0
      %v1462 = vadd.f32 %v1365, %v1461
      %v1463 = vpop.f32.mrb[0].mxu0
      %1464 = vmatprep.mubr.bf16.mxu0 0
      %1465 = vmatmul.mubr.bf16.gmra.mrb[0].mxu0 %v1180
      %v1466 = vpop.f32.mrb[0].mxu0
      %v1467 = vadd.f32 %v1370, %v1466
      %v1468 = vpop.f32.mrb[0].mxu0
      %v1469 = vpop.f32.mrb[0].mxu0
      %v1470 = vadd.f32 %v1373, %v1469
      %v1471 = vpop.f32.mrb[0].mxu0
      %1472 = vdwg.mxu0
      %1473 = vst [vmem:[%s181] sm:$0xff] %v1411
      %1474 = vst [vmem:[%s181 + $0x8] sm:$0xff] %v1414
      %1475 = vst [vmem:[%s181 + $0x10] sm:$0xff] %v1419
      %1476 = vst [vmem:[%s181 + $0x18] sm:$0xff] %v1422
      %1477 = vst [vmem:[%s181 + $0x20] sm:$0xff] %v1427
      %1478 = vst [vmem:[%s181 + $0x28] sm:$0xff] %v1430
      %1479 = vst [vmem:[%s181 + $0x30] sm:$0xff] %v1435
      %1480 = vst [vmem:[%s181 + $0x38] sm:$0xff] %v1438
      %1481 = vst [vmem:[%s181 + $0x40] sm:$0xff] %v1443
      %1482 = vst [vmem:[%s181 + $0x48] sm:$0xff] %v1446
      %1483 = vst [vmem:[%s181 + $0x50] sm:$0xff] %v1451
      %1484 = vst [vmem:[%s181 + $0x58] sm:$0xff] %v1454
      %1485 = vst [vmem:[%s181 + $0x60] sm:$0xff] %v1459
      %1486 = vst [vmem:[%s181 + $0x68] sm:$0xff] %v1462
      %1487 = vst [vmem:[%s181 + $0x70] sm:$0xff] %v1467
      %1488 = vst [vmem:[%s181 + $0x78] sm:$0xff] %v1470
      %s1489 = smul.u32 8, %s18
      %p1490 = scmp.lt.s32.totalorder %s17, 1
      %s1491 = scalar_select %p1490, %s17, 1
      %p1492 = scmp.lt.s32.totalorder %s1489, 15
      %s1493 = scalar_select %p1492, %s1489, 15
      %s1494 = smul.addr %s1493, 2
      %s1495 = smul.addr %s1491, 32
      %s1496 = sadd.s32 %s1494, %s1495
      %s1497 = smul.addr %s1496, 8
      %s1498 = scalar_lea.vmem %s2, %s1497
      // Predicated region
      $region29: #{upsample_forward.1} parent=27 // pred_check
        %p1499 = pneg %p94
      $region30: #{upsample_forward.1} parent=27 // pred_check_branch
        %1501 = sbr.rel (%p1499) target = $region32
      $region31: #{upsample_forward.1} parent=27 // pred_region
        %s1502 = smul.u32 8, %s18
      $region32: #{upsample_forward.1} parent=27 // pred_fallthru
        _
    $region28: #{upsample_forward.1} parent=5 // pred_fallthru
      _
    %p1503 = scmp.le.s32.totalorder 2, %s8
    // Predicated region
    $region33: #{upsample_forward.1} parent=5 // pred_check
      %p1504 = pneg %p1503
    $region34: #{upsample_forward.1} parent=5 // pred_check_branch
      %1506 = sbr.rel (%p1504) target = $region36
    $region35: #{upsample_forward.1} parent=5 // pred_region
      %s1507 = ssub.s32 %s8, 2
      // Predicated region
      $region37: #{upsample_forward.1} parent=35 // pred_check
        %p1508 = pneg %p100
      $region38: #{upsample_forward.1} parent=35 // pred_check_branch
        %1510 = sbr.rel (%p1508) target = $region40
      $region39: #{upsample_forward.1} parent=35 // pred_region
        %s1511 = smul.u32 8, %s20
        %p1512 = scmp.lt.s32.totalorder %s19, 1
        %s1513 = scalar_select %p1512, %s19, 1
        %p1514 = scmp.lt.s32.totalorder %s1511, 15
        %s1515 = scalar_select %p1514, %s1511, 15
        %s1516 = smul.addr %s1515, 2
        %s1517 = smul.addr %s1513, 32
        %s1518 = sadd.s32 %s1516, %s1517
        %s1519 = smul.addr %s1518, 8
        %s1520 = scalar_lea.vmem %s2, %s1519
      $region40: #{upsample_forward.1} parent=35 // pred_fallthru
        _
    $region36: #{upsample_forward.1} parent=5 // pred_fallthru
      _
  $region6: #{upsample_forward.1} parent=0 // loop_footer
    %s12 = sadd.s32 1, %s8
  $region7: #{upsample_forward.1} parent=0 // loop_footer_branch
    %7 = sbr.rel target = $region3
  $region8: #{upsample_forward.1} parent=0 // loop_exit
    _

</llo_original>
